<compile_context>
chip_gen: v7x
topology: tpu7x:2x2x1
jax: 0.10.0
libtpu: 0.0.40
codegen_flags: <defaults>
</compile_context>

<pallas_src>
import functools

import jax
import jax.numpy as jnp
from jax.experimental import pallas as pl
from jax.experimental.pallas import tpu as pltpu


# ---------------------------------------------------------------------------
# Kernel 1: fused projection for BOTH views.
# ---------------------------------------------------------------------------
def _project_kernel(x_ref, wt_ref, b_ref, zn_ref, *, inv_sqrt_temp, apply_srelu):
    b = b_ref[...]                                                   # (1, m) f32
    # bf16 x bf16 -> f32 accumulation on the MXU.
    z = jnp.dot(x_ref[...], wt_ref[...],
                preferred_element_type=jnp.float32) + b              # (tz, m) f32
    if apply_srelu:
        # SymReLU(z, b) = relu(z) - relu(2b - z)   (assumed definition, see TODO above)
        z = jnp.maximum(z, 0.0) - jnp.maximum(2.0 * b - z, 0.0)
    # rsqrt (EUP slot) replaces sqrt + max + divide; temperature folded into the row
    # scale so the O((2B)^2) similarity matrix needs no extra per-element divide.
    inv = jax.lax.rsqrt(jnp.sum(z * z, axis=1, keepdims=True) + 1e-12)
    zn_ref[...] = z * (inv * inv_sqrt_temp)


# ---------------------------------------------------------------------------
# Kernel 2: NT-Xent with an online (flash-softmax) LSE over column blocks.
# ---------------------------------------------------------------------------
def _ntxent_kernel(zn_row_ref, zn_pos_ref, zn_col_ref, out_ref, m_sc, l_sc, *,
                   row_tile, col_tile):
    r = pl.program_id(0)
    c = pl.program_id(1)

    @pl.when(c == 0)
    def _():
        m_sc[...] = jnp.full_like(m_sc, -1e30)
        l_sc[...] = jnp.zeros_like(l_sc)

    zr = zn_row_ref[...]                                             # (tr, m) f32, already /sqrt(T)
    # sim / T for this (row block, col block):  (tr, m) x (tc, m)^T on the MXU.
    s = jax.lax.dot_general(zr, zn_col_ref[...], (((1,), (1,)), ((), ())),
                            preferred_element_type=jnp.float32)      # (tr, tc)

    # Exclude self-similarity (global diagonal only; positives stay in the denominator,
    # matching the standard NT_Xent logits [pos, negatives]).
    row_ids = r * row_tile + jax.lax.broadcasted_iota(jnp.int32, s.shape, 0)
    col_ids = c * col_tile + jax.lax.broadcasted_iota(jnp.int32, s.shape, 1)
    s = jnp.where(row_ids == col_ids, jnp.float32(-1e30), s)

    m_prev = m_sc[...]
    m_new = jnp.maximum(m_prev, jnp.max(s, axis=1, keepdims=True))
    l_sc[...] = (jnp.exp(m_prev - m_new) * l_sc[...]
                 + jnp.sum(jnp.exp(s - m_new), axis=1, keepdims=True))
    m_sc[...] = m_new

    @pl.when(c == pl.num_programs(1) - 1)
    def _():
        # Positive logit: elementwise dot with the partner row block (the +B offset is
        # handled by the index_map), replacing the O((2B)^2) iota/where/sum.
        pos = jnp.sum(zr * zn_pos_ref[...], axis=1, keepdims=True)   # (tr, 1)
        lse = m_sc[...] + jnp.log(l_sc[...])
        partial = jnp.sum(lse - pos)                                 # CE(sum) over this block
        # Lane-dense (1,1,128) store (broadcast scalar) instead of a masked 1-lane vst.
        out_ref[...] = jnp.full(out_ref.shape, partial, jnp.float32)


def _pick_tile(n, target):
    """Largest tile <= target that divides n."""
    t = max(1, min(n, target))
    while n % t:
        t -= 1
    return t


def simclr_forward(x1, x2, wt, bias, *, temperature=0.05,
                   has_online_relu=True, has_target_relu=True,
                   row_tile=None, col_tile=None):
    """SimCLR forward.

    x1, x2 : (B, p) views.
    wt     : (p, m) Linear weight stored persistently in transposed layout
             (= Wo.weight.T, transposed ONCE at parameter setup, not per call).
    bias   : (m,).
    Returns the scalar NT-Xent loss.
    """
    B, p = x1.shape
    m = wt.shape[1]
    n = 2 * B

    # One fused (2B, p) projection instead of two per-view matmuls; bf16 MXU operands
    # (post-matmul elementwise / exp / LSE math stays in f32).
    x = jnp.concatenate([jnp.asarray(x1), jnp.asarray(x2)], axis=0).astype(jnp.bfloat16)
    wt_bf16 = jnp.asarray(wt).astype(jnp.bfloat16)
    b2 = jnp.asarray(bias, jnp.float32).reshape(1, m)

    apply_srelu = bool(has_online_relu and has_target_relu)   # module gates BOTH on the AND
    inv_sqrt_temp = float(temperature) ** -0.5

    # Tiles (work best when B and 2B are multiples of 8; row tile must divide B so the
    # +B positive partner is block aligned).
    tz = _pick_tile(n, 256)                       # projection row tile
    tr = row_tile if row_tile is not None else _pick_tile(B, 256)
    tc = col_tile if col_tile is not None else _pick_tile(n, 256)
    nr = n // tr
    nc = n // tc
    pos_off = B // tr                             # partner row-block offset

    # ---------------- projection: zn = normalize(SymReLU(X @ Wt + b)) / sqrt(T) -------
    zn = pl.pallas_call(
        functools.partial(_project_kernel, inv_sqrt_temp=inv_sqrt_temp,
                          apply_srelu=apply_srelu),
        out_shape=jax.ShapeDtypeStruct((n, m), jnp.float32),
        grid=(n // tz,),
        in_specs=[
            pl.BlockSpec((tz, p), lambda i: (i, 0)),
            pl.BlockSpec((p, m), lambda i: (0, 0)),
            pl.BlockSpec((1, m), lambda i: (0, 0)),
        ],
        out_specs=pl.BlockSpec((tz, m), lambda i: (i, 0)),
        compiler_params=pltpu.CompilerParams(
            dimension_semantics=("parallel",),
            vmem_limit_bytes=32 * 1024 * 1024),
    )(x, wt_bf16, b2)

    # ---------------- NT-Xent loss: online LSE over column blocks ---------------------
    partials = pl.pallas_call(
        functools.partial(_ntxent_kernel, row_tile=tr, col_tile=tc),
        out_shape=jax.ShapeDtypeStruct((nr, 1, 128), jnp.float32),
        grid=(nr, nc),
        in_specs=[
            pl.BlockSpec((tr, m), lambda r, c: (r, 0)),                    # row block
            pl.BlockSpec((tr, m), lambda r, c: ((r + pos_off) % nr, 0)),   # partner block
            pl.BlockSpec((tc, m), lambda r, c: (c, 0)),                    # streamed cols
        ],
        out_specs=pl.BlockSpec((1, 1, 128), lambda r, c: (r, 0, 0)),
        scratch_shapes=[pltpu.VMEM((tr, 1), jnp.float32),   # running max
                        pltpu.VMEM((tr, 1), jnp.float32)],  # running sum-exp
        compiler_params=pltpu.CompilerParams(
            dimension_semantics=("parallel", "arbitrary"),
            vmem_limit_bytes=32 * 1024 * 1024),
    )(zn, zn, zn)

    # CrossEntropy(reduction="sum") / (2B)
    return jnp.sum(partials[:, 0, 0]) / jnp.float32(n)


def _reference_loss(x1, x2, wt, bias, *, temperature, apply_srelu):
    """Pure-JAX reference (same dtype policy: bf16 matmul operands, f32 elsewhere)."""
    x = jnp.concatenate([x1, x2], axis=0).astype(jnp.bfloat16)
    z = jnp.dot(x, wt.astype(jnp.bfloat16),
                preferred_element_type=jnp.float32) + bias[None, :]
    if apply_srelu:
        z = jnp.maximum(z, 0.0) - jnp.maximum(2.0 * bias[None, :] - z, 0.0)
    zn = z * jax.lax.rsqrt(jnp.sum(z * z, axis=1, keepdims=True) + 1e-12)
    n = z.shape[0]
    B = n // 2
    sim = (zn @ zn.T) / temperature
    idx = jnp.arange(n)
    pos = sim[idx, (idx + B) % n]
    sim = jnp.where(jnp.eye(n, dtype=bool), -1e30, sim)
    mx = jnp.max(sim, axis=1, keepdims=True)
    lse = jnp.log(jnp.sum(jnp.exp(sim - mx), axis=1)) + mx[:, 0]
    return jnp.sum(lse - pos) / n


if __name__ == "__main__":
    # Small but lane-dense shapes consistent with the module (batch B, input p, output m).
    B, p, m, d = 8, 128, 128, 64
    temperature = 0.05

    key = jax.random.PRNGKey(0)
    k1, k2, k3, k4 = jax.random.split(key, 4)

    # nn.Linear(p, m): weight (m, p), bias (m,).
    Wo_init = jax.random.normal(k1, (m, p), jnp.float32) / jnp.sqrt(jnp.float32(p))
    bound = 1.0 / jnp.sqrt(jnp.float32(p))
    bias = jax.random.uniform(k2, (m,), jnp.float32, minval=-bound, maxval=bound)

    # Two augmented "views".
    x1 = jax.random.normal(k3, (B, p), jnp.float32)
    x2 = jax.random.normal(k4, (B, p), jnp.float32)

    # Weight transposed ONCE at setup (stored persistently in (p, m) layout).
    wt = jnp.asarray(Wo_init).T

    # row_tile=8 / col_tile=8 -> grid (2, 2): exercises init / online-LSE accumulation /
    # finalize and the partner-block index map.
    loss = simclr_forward(x1, x2, wt, bias, temperature=temperature,
                          row_tile=8, col_tile=8)
    loss = jax.block_until_ready(loss)

    ref = _reference_loss(x1, x2, wt, bias, temperature=temperature, apply_srelu=True)
    ref = jax.block_until_ready(ref)

    assert jnp.isfinite(loss), "loss is not finite"
    assert jnp.allclose(loss, ref, rtol=1e-2, atol=1e-2), (loss, ref)
    print("KERNEL_OK")
</pallas_src>

<mosaic_0001>
module attributes {stable_mosaic.version = 11 : i64} {
  func.func @_project_kernel(%arg0: i32, %arg1: memref<16x128xbf16, #tpu.memory_space<vmem>>, %arg2: memref<128x128xbf16, #tpu.memory_space<vmem>>, %arg3: memref<1x128xf32, #tpu.memory_space<vmem>>, %arg4: memref<16x128xf32, #tpu.memory_space<vmem>>) attributes {dimension_semantics = [#tpu.dimension_semantics<parallel>], iteration_bounds = array<i64: 1>, scalar_prefetch = 0 : i64, scratch_operands = 0 : i64, tpu.core_type = #tpu.core_type<tc>, window_params = [{transform_indices = @transform_0, window_bounds = array<i64: 16, 128>}, {pipeline_mode = #tpu.pipeline_mode<synchronous>, transform_indices = @transform_1, window_bounds = array<i64: 128, 128>}, {pipeline_mode = #tpu.pipeline_mode<synchronous>, transform_indices = @transform_2, window_bounds = array<i64: 1, 128>}, {transform_indices = @transform_3, window_bounds = array<i64: 16, 128>}]} {
    %c0 = arith.constant 0 : index
    %c0_0 = arith.constant 0 : index
    %0 = vector.load %arg3[%c0, %c0_0] : memref<1x128xf32, #tpu.memory_space<vmem>>, vector<1x128xf32>
    %c0_1 = arith.constant 0 : index
    %c0_2 = arith.constant 0 : index
    %1 = vector.load %arg1[%c0_1, %c0_2] : memref<16x128xbf16, #tpu.memory_space<vmem>>, vector<16x128xbf16>
    %c0_3 = arith.constant 0 : index
    %c0_4 = arith.constant 0 : index
    %2 = vector.load %arg2[%c0_3, %c0_4] : memref<128x128xbf16, #tpu.memory_space<vmem>>, vector<128x128xbf16>
    %cst = arith.constant dense<0.000000e+00> : vector<16x128xf32>
    %3 = tpu.matmul %1, %2, %cst {dimension_numbers = #tpu.dot_dimension_numbers<[1], [0], [0], [1], [0, 0, 1, 1], [], []>} : vector<16x128xbf16>, vector<128x128xbf16>, vector<16x128xf32> -> vector<16x128xf32>
    %4 = vector.broadcast %0 : vector<1x128xf32> to vector<16x128xf32>
    %5 = arith.addf %3, %4 : vector<16x128xf32>
    %cst_5 = arith.constant 0.000000e+00 : f32
    %6 = vector.broadcast %cst_5 : f32 to vector<16x128xf32>
    %7 = arith.maximumf %5, %6 : vector<16x128xf32>
    %cst_6 = arith.constant 2.000000e+00 : f32
    %8 = vector.broadcast %cst_6 : f32 to vector<1x128xf32>
    %9 = arith.mulf %8, %0 : vector<1x128xf32>
    %10 = vector.broadcast %9 : vector<1x128xf32> to vector<16x128xf32>
    %11 = arith.subf %10, %5 : vector<16x128xf32>
    %cst_7 = arith.constant 0.000000e+00 : f32
    %12 = vector.broadcast %cst_7 : f32 to vector<16x128xf32>
    %13 = arith.maximumf %11, %12 : vector<16x128xf32>
    %14 = arith.subf %7, %13 : vector<16x128xf32>
    %15 = arith.mulf %14, %14 : vector<16x128xf32>
    %cst_8 = arith.constant dense<0.000000e+00> : vector<16xf32>
    %16 = vector.multi_reduction <add>, %15, %cst_8 [1] : vector<16x128xf32> to vector<16xf32>
    %17 = vector.shape_cast %16 : vector<16xf32> to vector<16x1xf32>
    %cst_9 = arith.constant 9.99999996E-13 : f32
    %18 = vector.broadcast %cst_9 : f32 to vector<16x1xf32>
    %19 = arith.addf %17, %18 : vector<16x1xf32>
    %20 = math.rsqrt %19 : vector<16x1xf32>
    %cst_10 = arith.constant 4.47213602 : f32
    %21 = vector.broadcast %cst_10 : f32 to vector<16x1xf32>
    %22 = arith.mulf %20, %21 : vector<16x1xf32>
    %23 = vector.broadcast %22 : vector<16x1xf32> to vector<16x128xf32>
    %24 = arith.mulf %14, %23 : vector<16x128xf32>
    %c0_11 = arith.constant 0 : index
    %c0_12 = arith.constant 0 : index
    %25 = vector.load %arg4[%c0_11, %c0_12] : memref<16x128xf32, #tpu.memory_space<vmem>>, vector<16x128xf32>
    tpu.vector_store %arg4[%c0_11, %c0_12], %24 {strides = array<i32>} : memref<16x128xf32, #tpu.memory_space<vmem>>, vector<16x128xf32>,
    return
  }
  func.func @transform_0(%arg0: i32) -> (i32, i32) {
    %c0_i32 = arith.constant 0 : i32
    %c0_i32_0 = arith.constant 0 : i32
    return %arg0, %c0_i32 : i32, i32
  }
  func.func @transform_1(%arg0: i32) -> (i32, i32) {
    %c0_i32 = arith.constant 0 : i32
    %c0_i32_0 = arith.constant 0 : i32
    %c0_i32_1 = arith.constant 0 : i32
    return %c0_i32, %c0_i32_0 : i32, i32
  }
  func.func @transform_2(%arg0: i32) -> (i32, i32) {
    %c0_i32 = arith.constant 0 : i32
    %c0_i32_0 = arith.constant 0 : i32
    %c0_i32_1 = arith.constant 0 : i32
    return %c0_i32, %c0_i32_0 : i32, i32
  }
  func.func @transform_3(%arg0: i32) -> (i32, i32) {
    %c0_i32 = arith.constant 0 : i32
    %c0_i32_0 = arith.constant 0 : i32
    return %arg0, %c0_i32 : i32, i32
  }
}

</mosaic_0001>

<llo_original>
// kernel: tpu_custom_call.1
$region0: #{tpu_custom_call.1}
  #allocation0 [shape = 'u32[]', space=smem, size = 0x4, offset = 0x4, fixed_abs, tag = 'smem constant byte address 0x4 - core index']
  #allocation1 [shape = 'u32[144,128]{1,0:T(1,128)}', space=vmem, size = 0x12000, scoped, tag = 'internal scratch']
  %s0 = inlined_call_operand.hbm [shape: bf16[16,128], index: 0, kind: input, shape index: {}]
  %s1 = inlined_call_operand.hbm [shape: bf16[128,128], index: 1, kind: input, shape index: {}]
  %s2 = inlined_call_operand.vmem [shape: f32[1,128], index: 2, kind: input, shape index: {}]
  %s3 = inlined_call_operand.hbm [shape: f32[16,128], index: 3, kind: output, shape index: {}]
  %s4 = sld [smem:[#allocation0]]
  $region30: #{tpu_custom_call.1} parent=0
    _
  %s6 = ssub.s32 1, %s4
  %s7 = scalar_select 0, %s6, %s4
  $region1: #{tpu_custom_call.1} parent=0
    #allocation2 [shape = 'u8[4096]{0}', space=vmem, size = 0x1000, scoped, tag = 'input window, operand 0, single buffered']
    #allocation3 [shape = 's32[1]{0}', space=sflag, size = 0x4, scoped, tag = 'scoped memory for tpu_custom_call.1']
    #allocation4 [shape = 's32[1]{0}', space=sflag, size = 0x4, scoped, tag = 'scoped memory for tpu_custom_call.1']
    #allocation5 [shape = 'u8[32768]{0}', space=vmem, size = 0x8000, scoped, tag = 'input window, operand 1, single buffered']
    #allocation6 [shape = 's32[1]{0}', space=sflag, size = 0x4, scoped, tag = 'scoped memory for tpu_custom_call.1']
    #allocation7 [shape = 'u8[8192]{0}', space=vmem, size = 0x2000, scoped, tag = 'output window, operand 0, single buffered']
    %8 = vsyncpa [#allocation3], 0
    %9 = vsyncpa [#allocation6], 0
    %10 = vsyncpa [#allocation4], 0
    // Predicated region
    $region2: #{tpu_custom_call.1} parent=1 // pred_check
      _
    $region3: #{tpu_custom_call.1} parent=1 // pred_check_branch
      %12 = sbr.rel (0) target = $region5
    $region4: #{tpu_custom_call.1} parent=1 // pred_region
      %s14 = ssub.s32 128, 128
      %15 = vsyncadd [#allocation3], %s14
      %s16 = sshll.u32 [#allocation2], 4
      %s17 = int_to_ptr.vmem [resolvable:$true] %s16
      %22 = dma.hbm_to_vmem [thread:$0]  %s0, 128, %s17, [#allocation3], 64, 64, 4
    $region5: #{tpu_custom_call.1} parent=1 // pred_fallthru
      _
    // Predicated region
    $region6: #{tpu_custom_call.1} parent=1 // pred_check
      _
    $region7: #{tpu_custom_call.1} parent=1 // pred_check_branch
      %24 = sbr.rel (0) target = $region9
    $region8: #{tpu_custom_call.1} parent=1 // pred_region
      %s26 = ssub.s32 1024, 1024
      %27 = vsyncadd [#allocation6], %s26
      %s28 = sshll.u32 [#allocation5], 4
      %s29 = int_to_ptr.vmem [resolvable:$true] %s28
      %34 = dma.hbm_to_vmem [thread:$0]  %s1, 1024, %s29, [#allocation6], 64, 64, 4
    $region9: #{tpu_custom_call.1} parent=1 // pred_fallthru
      _
    // Predicated region
    $region10: #{tpu_custom_call.1} parent=1 // pred_check
      _
    $region11: #{tpu_custom_call.1} parent=1 // pred_check_branch
      %36 = sbr.rel (0) target = $region13
    $region12: #{tpu_custom_call.1} parent=1 // pred_region
      _
    $region13: #{tpu_custom_call.1} parent=1 // pred_fallthru
      _
    // Predicated region
    $region14: #{tpu_custom_call.1} parent=1 // pred_check
      _
    $region15: #{tpu_custom_call.1} parent=1 // pred_check_branch
      %38 = sbr.rel (0) target = $region17
    $region16: #{tpu_custom_call.1} parent=1 // pred_region
      %39 = dma.done [#allocation3], 128
    $region17: #{tpu_custom_call.1} parent=1 // pred_fallthru
      _
    // Predicated region
    $region18: #{tpu_custom_call.1} parent=1 // pred_check
      _
    $region19: #{tpu_custom_call.1} parent=1 // pred_check_branch
      %41 = sbr.rel (0) target = $region21
    $region20: #{tpu_custom_call.1} parent=1 // pred_region
      %42 = dma.done [#allocation6], 1024
    $region21: #{tpu_custom_call.1} parent=1 // pred_fallthru
      _
    %v44 = vld [vmem:[%s2] sm:$0x1]
    %v45 = vld [vmem:[#allocation2] sm:$0xf]
    %v46 = vld [vmem:[#allocation2 + $0x4] sm:$0xf]
    %v47 = vld [vmem:[#allocation5] sm:$0xf]
    %v48 = vld [vmem:[#allocation5 + $0x4] sm:$0xf]
    %v49 = vld [vmem:[#allocation5 + $0x8] sm:$0xf]
    %v50 = vld [vmem:[#allocation5 + $0xc] sm:$0xf]
    %v51 = vld [vmem:[#allocation5 + $0x10] sm:$0xf]
    %v52 = vld [vmem:[#allocation5 + $0x14] sm:$0xf]
    %v53 = vld [vmem:[#allocation5 + $0x18] sm:$0xf]
    %v54 = vld [vmem:[#allocation5 + $0x1c] sm:$0xf]
    %v55 = vld [vmem:[#allocation5 + $0x20] sm:$0xf]
    %v56 = vld [vmem:[#allocation5 + $0x24] sm:$0xf]
    %v57 = vld [vmem:[#allocation5 + $0x28] sm:$0xf]
    %v58 = vld [vmem:[#allocation5 + $0x2c] sm:$0xf]
    %v59 = vld [vmem:[#allocation5 + $0x30] sm:$0xf]
    %v60 = vld [vmem:[#allocation5 + $0x34] sm:$0xf]
    %v61 = vld [vmem:[#allocation5 + $0x38] sm:$0xf]
    %v62 = vld [vmem:[#allocation5 + $0x3c] sm:$0xf]
    %v64 = vlaneseq
    %v65 = vshrl.u32 %v64, 7
    %v66 = vsub.s32 0, %v65
    %v67 = vrot.slane %v44, %v66
    %v71 = vunpack.c.l.b16 %v45
    %v72 = vunpack.c.l.b16 %v46
    %v73 = vpack.c.b16 %v72, %v71
    %v91 = vunpack.c.l.b16 %v47
    %v92 = vunpack.c.l.b16 %v48
    %v93 = vunpack.c.l.b16 %v49
    %v94 = vunpack.c.l.b16 %v50
    %v95 = vunpack.c.l.b16 %v51
    %v96 = vunpack.c.l.b16 %v52
    %v97 = vunpack.c.l.b16 %v53
    %v98 = vunpack.c.l.b16 %v54
    %v99 = vunpack.c.l.b16 %v55
    %v100 = vunpack.c.l.b16 %v56
    %v101 = vunpack.c.l.b16 %v57
    %v102 = vunpack.c.l.b16 %v58
    %v103 = vunpack.c.l.b16 %v59
    %v104 = vunpack.c.l.b16 %v60
    %v105 = vunpack.c.l.b16 %v61
    %v106 = vunpack.c.l.b16 %v62
    %v107 = vpack.c.b16 %v92, %v91
    %v108 = vpack.c.b16 %v94, %v93
    %v109 = vpack.c.b16 %v96, %v95
    %v110 = vpack.c.b16 %v98, %v97
    %v111 = vpack.c.b16 %v100, %v99
    %v112 = vpack.c.b16 %v102, %v101
    %v113 = vpack.c.b16 %v104, %v103
    %v114 = vpack.c.b16 %v106, %v105
    %123 = vmatprep.subr.bf16.mxu0 0
    %124 = vmatpush1.bf16.msra.mxu0 %v107
    %125 = vmatprep.subr.bf16.mxu0 0
    %126 = vmatpush1.bf16.msra.mxu0 %v108
    %127 = vmatprep.subr.bf16.mxu0 0
    %128 = vmatpush1.bf16.msra.mxu0 %v109
    %129 = vmatprep.subr.bf16.mxu0 0
    %130 = vmatpush1.bf16.msra.mxu0 %v110
    %131 = vmatprep.subr.bf16.mxu0 0
    %132 = vmatpush1.bf16.msra.mxu0 %v111
    %133 = vmatprep.subr.bf16.mxu0 0
    %134 = vmatpush1.bf16.msra.mxu0 %v112
    %135 = vmatprep.subr.bf16.mxu0 0
    %136 = vmatpush1.bf16.msra.mxu0 %v113
    %137 = vmatprep.subr.bf16.mxu0 0
    %138 = vmatpush1.bf16.msra.mxu0 %v114
    %139 = vmatprep.subr.bf16.mxu0 0
    %140 = vmatpush1.bf16.msra.mxu0 0
    %141 = vmatprep.subr.bf16.mxu0 0
    %142 = vmatpush1.bf16.msra.mxu0 0
    %143 = vmatprep.subr.bf16.mxu0 0
    %144 = vmatpush1.bf16.msra.mxu0 0
    %145 = vmatprep.subr.bf16.mxu0 0
    %146 = vmatpush1.bf16.msra.mxu0 0
    %147 = vmatprep.subr.bf16.mxu0 0
    %148 = vmatpush1.bf16.msra.mxu0 0
    %149 = vmatprep.subr.bf16.mxu0 0
    %150 = vmatpush1.bf16.msra.mxu0 0
    %151 = vmatprep.subr.bf16.mxu0 0
    %152 = vmatpush1.bf16.msra.mxu0 0
    %153 = vmatprep.subr.bf16.mxu0 0
    %154 = vmatpush1.bf16.msra.mxu0 0
    %155 = vmatprep.mubr.bf16.mxu0 0
    %156 = vmatmul.mubr.bf16.gmra.mrb[0].mxu0 %v73
    %v157 = vpop.f32.mrb[0].mxu0
    %v158 = vadd.f32 %v67, %v157
    %v159 = vpop.f32.mrb[0].mxu0
    %v160 = vpop.f32.mrb[0].mxu0
    %v161 = vadd.f32 %v67, %v160
    %v162 = vpop.f32.mrb[0].mxu0
    %163 = vdwg.mxu0
    %v164 = vmax.f32 %v158, 0.0
    %v165 = vmax.f32 %v161, 0.0
    %v166 = vmul.f32 %v44, 2.0
    %v168 = vlaneseq
    %v169 = vshrl.u32 %v168, 7
    %v170 = vsub.s32 0, %v169
    %v171 = vrot.slane %v166, %v170
    %v173 = vsub.f32 %v171, %v158
    %v174 = vsub.f32 %v171, %v161
    %v175 = vmax.f32 %v173, 0.0
    %v176 = vmax.f32 %v174, 0.0
    %v177 = vsub.f32 %v164, %v175
    %v178 = vsub.f32 %v165, %v176
    %v179 = vmul.f32 %v177, %v177
    %v180 = vmul.f32 %v178, %v178
    %181 = vadd.xlane.f32.xlu0 %v179
    %v182 = vpop.xlane.xlu0 %181
    %183 = vadd.xlane.f32.xlu0 %v180
    %v184 = vpop.xlane.xlu0 %183
    %v185 = vadd.f32 %v182, 1e-12
    %v186 = vadd.f32 %v184, 1e-12
    %v187 = vrsqrt.pop %v185
    %v188 = vrsqrt.pop %v186
    %v189 = vmul.f32 %v187, 4.472136
    %v190 = vmul.f32 %v188, 4.472136
    %v191 = vmul.f32 %v177, %v189
    %v192 = vmul.f32 %v178, %v190
    %193 = vst [vmem:[#allocation7] sm:$0xff] %v191
    %194 = vst [vmem:[#allocation7 + $0x8] sm:$0xff] %v192
    // Predicated region
    $region22: #{tpu_custom_call.1} parent=1 // pred_check
      _
    $region23: #{tpu_custom_call.1} parent=1 // pred_check_branch
      %196 = sbr.rel (0) target = $region25
    $region24: #{tpu_custom_call.1} parent=1 // pred_region
      %s198 = ssub.s32 256, 256
      %199 = vsyncadd [#allocation4], %s198
      %s200 = sshll.u32 [#allocation7], 4
      %s201 = int_to_ptr.vmem [resolvable:$true] %s200
      %206 = dma.vmem_to_hbm [thread:$0]  %s201, 256, %s3, [#allocation4], 128, 128, 8
    $region25: #{tpu_custom_call.1} parent=1 // pred_fallthru
      _
    // Predicated region
    $region26: #{tpu_custom_call.1} parent=1 // pred_check
      _
    $region27: #{tpu_custom_call.1} parent=1 // pred_check_branch
      %208 = sbr.rel (0) target = $region29
    $region28: #{tpu_custom_call.1} parent=1 // pred_region
      %209 = dma.done [#allocation4], 256
    $region29: #{tpu_custom_call.1} parent=1 // pred_fallthru
      _
    %210 = vsyncpa [#allocation3], 1
    %211 = vsyncpa [#allocation6], 1
    %212 = vsyncpa [#allocation4], 1

</llo_original>
